<compile_context>
chip_gen: v5e
topology: v5e:2x2
jax: 0.10.0
libtpu: 0.0.40
codegen_flags: <defaults>
</compile_context>

<pallas_src>
import functools

import jax
import jax.numpy as jnp
from jax.experimental import pallas as pl
from jax.experimental.pallas import tpu as pltpu

EPS = 1e-8  # matches self.eps in the PyTorch module


# --------------------------------------------------------------------------- #
# Single fused kernel: router -> prob normalization -> per-path aggregation    #
# --------------------------------------------------------------------------- #
def fused_kernel(num_cell, num_out_path,
                 x1_ref, x2_ref, w_ref, b_ref, mix_ref,
                 out1_ref, out2_ref):
    # x1_ref, x2_ref : (B, E, HW)     VMEM
    # w_ref          : (E, NC*P)      VMEM  (all cell routers batched; cell-major cols)
    # b_ref          : (1, NC*P)      VMEM
    # mix_ref        : (NC, 4)        SMEM  (synthetic per-cell mixing coefficients)
    # out1_ref       : (P, B, E, HW)  VMEM  (res1 for every out-path)
    # out2_ref       : (P, B, E, HW)  VMEM  (res2 for every out-path)
    x1 = x1_ref[...].astype(jnp.float32)
    x2 = x2_ref[...].astype(jnp.float32)

    # ---- batched router: one pool + one matmul + per-cell softmax ------------ #
    pooled = jnp.mean(x1 + x2, axis=-1)                               # (B, E)
    logits = jnp.dot(pooled, w_ref[...].astype(jnp.float32),
                     preferred_element_type=jnp.float32)
    logits = logits + b_ref[...].astype(jnp.float32)                  # (B, NC*P)

    probs = []
    for j in range(num_cell):                                         # static (4 cells)
        lj = logits[:, j * num_out_path:(j + 1) * num_out_path]       # (B, P)
        lj = lj - jnp.max(lj, axis=-1, keepdims=True)
        ej = jnp.exp(lj)
        probs.append(ej / jnp.sum(ej, axis=-1, keepdims=True))        # (B, P)

    # ---- cross-cell normalization (+eps), folded with `mix` ------------------ #
    denom = probs[0]
    for j in range(1, num_cell):
        denom = denom + probs[j]
    inv = 1.0 / (denom + EPS)                                         # (B, P)

    # c[k][b, i] = sum_j app[b, i, j] * mix[j, k]   (tiny (B,P) tensors)
    app0 = probs[0] * inv
    c = [app0 * mix_ref[0, k] for k in range(4)]
    for j in range(1, num_cell):
        appj = probs[j] * inv
        for k in range(4):
            c[k] = c[k] + appj * mix_ref[j, k]

    # ---- per-path aggregation: res = c_x1 * x1 + c_x2 * x2 ------------------- #
    for i in range(num_out_path):                                     # static (3 paths)
        w11 = c[0][:, i:i + 1][:, :, None]                            # (B, 1, 1)
        w12 = c[1][:, i:i + 1][:, :, None]
        w21 = c[2][:, i:i + 1][:, :, None]
        w22 = c[3][:, i:i + 1][:, :, None]
        out1_ref[i] = (w11 * x1 + w12 * x2).astype(out1_ref.dtype)
        out2_ref[i] = (w21 * x1 + w22 * x2).astype(out2_ref.dtype)


# --------------------------------------------------------------------------- #
# Module wrapper (glue): DynamicFusion_Layer0.forward                          #
# --------------------------------------------------------------------------- #
def dynamic_fusion_layer0(x1, x2, params):
    """x1, x2: NCHW (B, E, H, W).  Returns list of num_out_path pairs
    [res1_i, res2_i], each of shape (B, E, H, W)."""
    b, e, h, w = x1.shape
    hw = h * w
    x1f = x1.reshape(b, e, hw)
    x2f = x2.reshape(b, e, hw)

    nc, _, p = params["router_w"].shape
    # batch all routers into one (E, NC*P) weight; columns grouped per cell
    w_flat = jnp.transpose(params["router_w"], (1, 0, 2)).reshape(e, nc * p)
    b_flat = params["router_b"].reshape(1, nc * p)

    out_sds = jax.ShapeDtypeStruct((p, b, e, hw), x1.dtype)
    res1, res2 = pl.pallas_call(
        functools.partial(fused_kernel, nc, p),
        out_shape=(out_sds, out_sds),
        grid_spec=pltpu.PrefetchScalarGridSpec(
            num_scalar_prefetch=0,
            grid=(1,),
            in_specs=[
                pl.BlockSpec((b, e, hw), lambda i: (0, 0, 0)),
                pl.BlockSpec((b, e, hw), lambda i: (0, 0, 0)),
                pl.BlockSpec((e, nc * p), lambda i: (0, 0)),
                pl.BlockSpec((1, nc * p), lambda i: (0, 0)),
                pl.BlockSpec(memory_space=pltpu.MemorySpace.SMEM),
            ],
            out_specs=(
                pl.BlockSpec((p, b, e, hw), lambda i: (0, 0, 0, 0)),
                pl.BlockSpec((p, b, e, hw), lambda i: (0, 0, 0, 0)),
            ),
        ),
        compiler_params=pltpu.CompilerParams(
            dimension_semantics=("arbitrary",)),
    )(x1f, x2f, w_flat, b_flat, params["mix"])

    res1 = res1.reshape(p, b, e, h, w)
    res2 = res2.reshape(p, b, e, h, w)
    return [[res1[i], res2[i]] for i in range(p)]


# --------------------------------------------------------------------------- #
# Pure-jnp reference (for validation)                                          #
# --------------------------------------------------------------------------- #
def reference_jax(x1, x2, params):
    b, e, h, w = x1.shape
    x1f = x1.reshape(b, e, h * w).astype(jnp.float32)
    x2f = x2.reshape(b, e, h * w).astype(jnp.float32)
    pooled = jnp.mean(x1f + x2f, axis=-1)                        # (B, E)
    logits = jnp.einsum("be,cep->cbp", pooled, params["router_w"]) \
        + params["router_b"]                                     # (NC, B, P)
    probs = jax.nn.softmax(logits, axis=-1)                      # (NC, B, P)
    all_path_prob = jnp.transpose(probs, (1, 2, 0))              # (B, P, NC)
    all_path_prob = all_path_prob / (
        jnp.sum(all_path_prob, axis=-1, keepdims=True) + EPS)
    mix = params["mix"]
    nc = mix.shape[0]
    emb1 = jnp.stack([mix[j, 0] * x1f + mix[j, 1] * x2f for j in range(nc)])
    emb2 = jnp.stack([mix[j, 2] * x1f + mix[j, 3] * x2f for j in range(nc)])
    outs = []
    for i in range(all_path_prob.shape[1]):
        wgt = all_path_prob[:, i, :]                             # (B, NC)
        r1 = jnp.einsum("bj,jbn->bn", wgt,
                        emb1.reshape(nc, b, -1)).reshape(b, e, h, w)
        r2 = jnp.einsum("bj,jbn->bn", wgt,
                        emb2.reshape(nc, b, -1)).reshape(b, e, h, w)
        outs.append([r1, r2])
    return outs


if __name__ == "__main__":
    # Small shapes consistent with the module: 4 cells (fixed by forward),
    # num_out_path = 3, embed_size = 32, batch = 2, spatial = 16x16.
    NUM_CELL = 4
    NUM_OUT_PATH = 3
    EMBED = 32
    B, H, W = 2, 16, 16

    key = jax.random.PRNGKey(0)
    k1, k2, k3, k4, k5 = jax.random.split(key, 5)
    x1 = jax.random.normal(k1, (B, EMBED, H, W), jnp.float32)
    x2 = jax.random.normal(k2, (B, EMBED, H, W), jnp.float32)

    params = {
        # router: per-cell linear (embed_size -> num_out_path) + bias
        "router_w": 0.1 * jax.random.normal(
            k3, (NUM_CELL, EMBED, NUM_OUT_PATH), jnp.float32),
        "router_b": 0.1 * jax.random.normal(
            k4, (NUM_CELL, 1, NUM_OUT_PATH), jnp.float32),
        # synthetic per-cell 2x2 mixing coefficients (stand-in cell bodies)
        "mix": 0.5 * jax.random.normal(k5, (NUM_CELL, 4), jnp.float32),
    }

    out = jax.block_until_ready(dynamic_fusion_layer0(x1, x2, params))
    ref = reference_jax(x1, x2, params)

    for i in range(NUM_OUT_PATH):
        for s in range(2):
            assert out[i][s].shape == (B, EMBED, H, W)
            assert jnp.allclose(out[i][s], ref[i][s], atol=1e-4, rtol=1e-4)

    print("KERNEL_OK")
</pallas_src>

<mosaic_0001>
module attributes {stable_mosaic.version = 11 : i64} {
  func.func @fused_kernel(%arg0: i32, %arg1: memref<2x32x256xf32, #tpu.memory_space<vmem>>, %arg2: memref<2x32x256xf32, #tpu.memory_space<vmem>>, %arg3: memref<32x12xf32, #tpu.memory_space<vmem>>, %arg4: memref<1x12xf32, #tpu.memory_space<vmem>>, %arg5: memref<4x4xf32, #tpu.memory_space<smem>>, %arg6: memref<3x2x32x256xf32, #tpu.memory_space<vmem>>, %arg7: memref<3x2x32x256xf32, #tpu.memory_space<vmem>>) attributes {dimension_semantics = [#tpu.dimension_semantics<arbitrary>], iteration_bounds = array<i64: 1>, scalar_prefetch = 0 : i64, scratch_operands = 0 : i64, tpu.core_type = #tpu.core_type<tc>, window_params = [{pipeline_mode = #tpu.pipeline_mode<synchronous>, transform_indices = @transform_0, window_bounds = array<i64: 2, 32, 256>}, {pipeline_mode = #tpu.pipeline_mode<synchronous>, transform_indices = @transform_1, window_bounds = array<i64: 2, 32, 256>}, {pipeline_mode = #tpu.pipeline_mode<synchronous>, transform_indices = @transform_2, window_bounds = array<i64: 32, 12>}, {pipeline_mode = #tpu.pipeline_mode<synchronous>, transform_indices = @transform_3, window_bounds = array<i64: 1, 12>}, {transform_indices = @transform_4, window_bounds = array<i64: 4, 4>}, {pipeline_mode = #tpu.pipeline_mode<synchronous>, transform_indices = @transform_5, window_bounds = array<i64: 3, 2, 32, 256>}, {pipeline_mode = #tpu.pipeline_mode<synchronous>, transform_indices = @transform_6, window_bounds = array<i64: 3, 2, 32, 256>}]} {
    %c0 = arith.constant 0 : index
    %c0_0 = arith.constant 0 : index
    %c0_1 = arith.constant 0 : index
    %0 = vector.load %arg1[%c0, %c0_0, %c0_1] : memref<2x32x256xf32, #tpu.memory_space<vmem>>, vector<2x32x256xf32>
    %c0_2 = arith.constant 0 : index
    %c0_3 = arith.constant 0 : index
    %c0_4 = arith.constant 0 : index
    %1 = vector.load %arg2[%c0_2, %c0_3, %c0_4] : memref<2x32x256xf32, #tpu.memory_space<vmem>>, vector<2x32x256xf32>
    %2 = arith.addf %0, %1 : vector<2x32x256xf32>
    %cst = arith.constant dense<0.000000e+00> : vector<2x32xf32>
    %3 = vector.multi_reduction <add>, %2, %cst [2] : vector<2x32x256xf32> to vector<2x32xf32>
    %cst_5 = arith.constant 2.560000e+02 : f32
    %4 = vector.broadcast %cst_5 : f32 to vector<2x32xf32>
    %5 = arith.divf %3, %4 : vector<2x32xf32>
    %c0_6 = arith.constant 0 : index
    %c0_7 = arith.constant 0 : index
    %6 = vector.load %arg3[%c0_6, %c0_7] : memref<32x12xf32, #tpu.memory_space<vmem>>, vector<32x12xf32>
    %cst_8 = arith.constant dense<0.000000e+00> : vector<2x12xf32>
    %7 = tpu.matmul %5, %6, %cst_8 {dimension_numbers = #tpu.dot_dimension_numbers<[1], [0], [0], [1], [0, 0, 1, 1], [], []>} : vector<2x32xf32>, vector<32x12xf32>, vector<2x12xf32> -> vector<2x12xf32>
    %c0_9 = arith.constant 0 : index
    %c0_10 = arith.constant 0 : index
    %8 = vector.load %arg4[%c0_9, %c0_10] : memref<1x12xf32, #tpu.memory_space<vmem>>, vector<1x12xf32>
    %9 = vector.broadcast %8 : vector<1x12xf32> to vector<2x12xf32>
    %10 = arith.addf %7, %9 : vector<2x12xf32>
    %11 = vector.extract_strided_slice %10 {offsets = [0, 0], sizes = [2, 3], strides = [1, 1]} : vector<2x12xf32> to vector<2x3xf32>
    %cst_11 = arith.constant dense<0xFF800000> : vector<2xf32>
    %12 = vector.multi_reduction <maximumf>, %11, %cst_11 [1] : vector<2x3xf32> to vector<2xf32>
    %13 = vector.shape_cast %12 : vector<2xf32> to vector<2x1xf32>
    %14 = vector.broadcast %13 : vector<2x1xf32> to vector<2x3xf32>
    %15 = arith.subf %11, %14 : vector<2x3xf32>
    %16 = math.exp %15 : vector<2x3xf32>
    %cst_12 = arith.constant dense<0.000000e+00> : vector<2xf32>
    %17 = vector.multi_reduction <add>, %16, %cst_12 [1] : vector<2x3xf32> to vector<2xf32>
    %18 = vector.shape_cast %17 : vector<2xf32> to vector<2x1xf32>
    %19 = vector.broadcast %18 : vector<2x1xf32> to vector<2x3xf32>
    %20 = arith.divf %16, %19 : vector<2x3xf32>
    %21 = vector.extract_strided_slice %10 {offsets = [0, 3], sizes = [2, 3], strides = [1, 1]} : vector<2x12xf32> to vector<2x3xf32>
    %cst_13 = arith.constant dense<0xFF800000> : vector<2xf32>
    %22 = vector.multi_reduction <maximumf>, %21, %cst_13 [1] : vector<2x3xf32> to vector<2xf32>
    %23 = vector.shape_cast %22 : vector<2xf32> to vector<2x1xf32>
    %24 = vector.broadcast %23 : vector<2x1xf32> to vector<2x3xf32>
    %25 = arith.subf %21, %24 : vector<2x3xf32>
    %26 = math.exp %25 : vector<2x3xf32>
    %cst_14 = arith.constant dense<0.000000e+00> : vector<2xf32>
    %27 = vector.multi_reduction <add>, %26, %cst_14 [1] : vector<2x3xf32> to vector<2xf32>
    %28 = vector.shape_cast %27 : vector<2xf32> to vector<2x1xf32>
    %29 = vector.broadcast %28 : vector<2x1xf32> to vector<2x3xf32>
    %30 = arith.divf %26, %29 : vector<2x3xf32>
    %31 = vector.extract_strided_slice %10 {offsets = [0, 6], sizes = [2, 3], strides = [1, 1]} : vector<2x12xf32> to vector<2x3xf32>
    %cst_15 = arith.constant dense<0xFF800000> : vector<2xf32>
    %32 = vector.multi_reduction <maximumf>, %31, %cst_15 [1] : vector<2x3xf32> to vector<2xf32>
    %33 = vector.shape_cast %32 : vector<2xf32> to vector<2x1xf32>
    %34 = vector.broadcast %33 : vector<2x1xf32> to vector<2x3xf32>
    %35 = arith.subf %31, %34 : vector<2x3xf32>
    %36 = math.exp %35 : vector<2x3xf32>
    %cst_16 = arith.constant dense<0.000000e+00> : vector<2xf32>
    %37 = vector.multi_reduction <add>, %36, %cst_16 [1] : vector<2x3xf32> to vector<2xf32>
    %38 = vector.shape_cast %37 : vector<2xf32> to vector<2x1xf32>
    %39 = vector.broadcast %38 : vector<2x1xf32> to vector<2x3xf32>
    %40 = arith.divf %36, %39 : vector<2x3xf32>
    %41 = vector.extract_strided_slice %10 {offsets = [0, 9], sizes = [2, 3], strides = [1, 1]} : vector<2x12xf32> to vector<2x3xf32>
    %cst_17 = arith.constant dense<0xFF800000> : vector<2xf32>
    %42 = vector.multi_reduction <maximumf>, %41, %cst_17 [1] : vector<2x3xf32> to vector<2xf32>
    %43 = vector.shape_cast %42 : vector<2xf32> to vector<2x1xf32>
    %44 = vector.broadcast %43 : vector<2x1xf32> to vector<2x3xf32>
    %45 = arith.subf %41, %44 : vector<2x3xf32>
    %46 = math.exp %45 : vector<2x3xf32>
    %cst_18 = arith.constant dense<0.000000e+00> : vector<2xf32>
    %47 = vector.multi_reduction <add>, %46, %cst_18 [1] : vector<2x3xf32> to vector<2xf32>
    %48 = vector.shape_cast %47 : vector<2xf32> to vector<2x1xf32>
    %49 = vector.broadcast %48 : vector<2x1xf32> to vector<2x3xf32>
    %50 = arith.divf %46, %49 : vector<2x3xf32>
    %51 = arith.addf %20, %30 : vector<2x3xf32>
    %52 = arith.addf %51, %40 : vector<2x3xf32>
    %53 = arith.addf %52, %50 : vector<2x3xf32>
    %cst_19 = arith.constant 9.99999993E-9 : f32
    %54 = vector.broadcast %cst_19 : f32 to vector<2x3xf32>
    %55 = arith.addf %53, %54 : vector<2x3xf32>
    %cst_20 = arith.constant 1.000000e+00 : f32
    %56 = vector.broadcast %cst_20 : f32 to vector<2x3xf32>
    %57 = arith.divf %56, %55 : vector<2x3xf32>
    %58 = arith.mulf %20, %57 : vector<2x3xf32>
    %c0_21 = arith.constant 0 : index
    %c0_22 = arith.constant 0 : index
    %59 = memref.load %arg5[%c0_21, %c0_22] : memref<4x4xf32, #tpu.memory_space<smem>>
    %60 = vector.broadcast %59 : f32 to vector<2x3xf32>
    %61 = arith.mulf %58, %60 : vector<2x3xf32>
    %c0_23 = arith.constant 0 : index
    %c1 = arith.constant 1 : index
    %62 = memref.load %arg5[%c0_23, %c1] : memref<4x4xf32, #tpu.memory_space<smem>>
    %63 = vector.broadcast %62 : f32 to vector<2x3xf32>
    %64 = arith.mulf %58, %63 : vector<2x3xf32>
    %c0_24 = arith.constant 0 : index
    %c2 = arith.constant 2 : index
    %65 = memref.load %arg5[%c0_24, %c2] : memref<4x4xf32, #tpu.memory_space<smem>>
    %66 = vector.broadcast %65 : f32 to vector<2x3xf32>
    %67 = arith.mulf %58, %66 : vector<2x3xf32>
    %c0_25 = arith.constant 0 : index
    %c3 = arith.constant 3 : index
    %68 = memref.load %arg5[%c0_25, %c3] : memref<4x4xf32, #tpu.memory_space<smem>>
    %69 = vector.broadcast %68 : f32 to vector<2x3xf32>
    %70 = arith.mulf %58, %69 : vector<2x3xf32>
    %71 = arith.mulf %30, %57 : vector<2x3xf32>
    %c1_26 = arith.constant 1 : index
    %c0_27 = arith.constant 0 : index
    %72 = memref.load %arg5[%c1_26, %c0_27] : memref<4x4xf32, #tpu.memory_space<smem>>
    %73 = vector.broadcast %72 : f32 to vector<2x3xf32>
    %74 = arith.mulf %71, %73 : vector<2x3xf32>
    %75 = arith.addf %61, %74 : vector<2x3xf32>
    %c1_28 = arith.constant 1 : index
    %c1_29 = arith.constant 1 : index
    %76 = memref.load %arg5[%c1_28, %c1_29] : memref<4x4xf32, #tpu.memory_space<smem>>
    %77 = vector.broadcast %76 : f32 to vector<2x3xf32>
    %78 = arith.mulf %71, %77 : vector<2x3xf32>
    %79 = arith.addf %64, %78 : vector<2x3xf32>
    %c1_30 = arith.constant 1 : index
    %c2_31 = arith.constant 2 : index
    %80 = memref.load %arg5[%c1_30, %c2_31] : memref<4x4xf32, #tpu.memory_space<smem>>
    %81 = vector.broadcast %80 : f32 to vector<2x3xf32>
    %82 = arith.mulf %71, %81 : vector<2x3xf32>
    %83 = arith.addf %67, %82 : vector<2x3xf32>
    %c1_32 = arith.constant 1 : index
    %c3_33 = arith.constant 3 : index
    %84 = memref.load %arg5[%c1_32, %c3_33] : memref<4x4xf32, #tpu.memory_space<smem>>
    %85 = vector.broadcast %84 : f32 to vector<2x3xf32>
    %86 = arith.mulf %71, %85 : vector<2x3xf32>
    %87 = arith.addf %70, %86 : vector<2x3xf32>
    %88 = arith.mulf %40, %57 : vector<2x3xf32>
    %c2_34 = arith.constant 2 : index
    %c0_35 = arith.constant 0 : index
    %89 = memref.load %arg5[%c2_34, %c0_35] : memref<4x4xf32, #tpu.memory_space<smem>>
    %90 = vector.broadcast %89 : f32 to vector<2x3xf32>
    %91 = arith.mulf %88, %90 : vector<2x3xf32>
    %92 = arith.addf %75, %91 : vector<2x3xf32>
    %c2_36 = arith.constant 2 : index
    %c1_37 = arith.constant 1 : index
    %93 = memref.load %arg5[%c2_36, %c1_37] : memref<4x4xf32, #tpu.memory_space<smem>>
    %94 = vector.broadcast %93 : f32 to vector<2x3xf32>
    %95 = arith.mulf %88, %94 : vector<2x3xf32>
    %96 = arith.addf %79, %95 : vector<2x3xf32>
    %c2_38 = arith.constant 2 : index
    %c2_39 = arith.constant 2 : index
    %97 = memref.load %arg5[%c2_38, %c2_39] : memref<4x4xf32, #tpu.memory_space<smem>>
    %98 = vector.broadcast %97 : f32 to vector<2x3xf32>
    %99 = arith.mulf %88, %98 : vector<2x3xf32>
    %100 = arith.addf %83, %99 : vector<2x3xf32>
    %c2_40 = arith.constant 2 : index
    %c3_41 = arith.constant 3 : index
    %101 = memref.load %arg5[%c2_40, %c3_41] : memref<4x4xf32, #tpu.memory_space<smem>>
    %102 = vector.broadcast %101 : f32 to vector<2x3xf32>
    %103 = arith.mulf %88, %102 : vector<2x3xf32>
    %104 = arith.addf %87, %103 : vector<2x3xf32>
    %105 = arith.mulf %50, %57 : vector<2x3xf32>
    %c3_42 = arith.constant 3 : index
    %c0_43 = arith.constant 0 : index
    %106 = memref.load %arg5[%c3_42, %c0_43] : memref<4x4xf32, #tpu.memory_space<smem>>
    %107 = vector.broadcast %106 : f32 to vector<2x3xf32>
    %108 = arith.mulf %105, %107 : vector<2x3xf32>
    %109 = arith.addf %92, %108 : vector<2x3xf32>
    %c3_44 = arith.constant 3 : index
    %c1_45 = arith.constant 1 : index
    %110 = memref.load %arg5[%c3_44, %c1_45] : memref<4x4xf32, #tpu.memory_space<smem>>
    %111 = vector.broadcast %110 : f32 to vector<2x3xf32>
    %112 = arith.mulf %105, %111 : vector<2x3xf32>
    %113 = arith.addf %96, %112 : vector<2x3xf32>
    %c3_46 = arith.constant 3 : index
    %c2_47 = arith.constant 2 : index
    %114 = memref.load %arg5[%c3_46, %c2_47] : memref<4x4xf32, #tpu.memory_space<smem>>
    %115 = vector.broadcast %114 : f32 to vector<2x3xf32>
    %116 = arith.mulf %105, %115 : vector<2x3xf32>
    %117 = arith.addf %100, %116 : vector<2x3xf32>
    %c3_48 = arith.constant 3 : index
    %c3_49 = arith.constant 3 : index
    %118 = memref.load %arg5[%c3_48, %c3_49] : memref<4x4xf32, #tpu.memory_space<smem>>
    %119 = vector.broadcast %118 : f32 to vector<2x3xf32>
    %120 = arith.mulf %105, %119 : vector<2x3xf32>
    %121 = arith.addf %104, %120 : vector<2x3xf32>
    %122 = vector.extract_strided_slice %109 {offsets = [0, 0], sizes = [2, 1], strides = [1, 1]} : vector<2x3xf32> to vector<2x1xf32>
    %123 = vector.shape_cast %122 : vector<2x1xf32> to vector<2x1x1xf32>
    %124 = vector.extract_strided_slice %113 {offsets = [0, 0], sizes = [2, 1], strides = [1, 1]} : vector<2x3xf32> to vector<2x1xf32>
    %125 = vector.shape_cast %124 : vector<2x1xf32> to vector<2x1x1xf32>
    %126 = vector.extract_strided_slice %117 {offsets = [0, 0], sizes = [2, 1], strides = [1, 1]} : vector<2x3xf32> to vector<2x1xf32>
    %127 = vector.shape_cast %126 : vector<2x1xf32> to vector<2x1x1xf32>
    %128 = vector.extract_strided_slice %121 {offsets = [0, 0], sizes = [2, 1], strides = [1, 1]} : vector<2x3xf32> to vector<2x1xf32>
    %129 = vector.shape_cast %128 : vector<2x1xf32> to vector<2x1x1xf32>
    %130 = vector.broadcast %123 : vector<2x1x1xf32> to vector<2x32x256xf32>
    %131 = arith.mulf %130, %0 : vector<2x32x256xf32>
    %132 = vector.broadcast %125 : vector<2x1x1xf32> to vector<2x32x256xf32>
    %133 = arith.mulf %132, %1 : vector<2x32x256xf32>
    %134 = arith.addf %131, %133 : vector<2x32x256xf32>
    %c0_50 = arith.constant 0 : index
    %c0_51 = arith.constant 0 : index
    %c0_52 = arith.constant 0 : index
    %c0_53 = arith.constant 0 : index
    %135 = vector.load %arg6[%c0_50, %c0_51, %c0_52, %c0_53] : memref<3x2x32x256xf32, #tpu.memory_space<vmem>>, vector<1x2x32x256xf32>
    %136 = vector.shape_cast %135 : vector<1x2x32x256xf32> to vector<2x32x256xf32>
    %137 = vector.shape_cast %134 : vector<2x32x256xf32> to vector<1x2x32x256xf32>
    tpu.vector_store %arg6[%c0_50, %c0_51, %c0_52, %c0_53], %137 {strides = array<i32>} : memref<3x2x32x256xf32, #tpu.memory_space<vmem>>, vector<1x2x32x256xf32>,
    %138 = vector.broadcast %127 : vector<2x1x1xf32> to vector<2x32x256xf32>
    %139 = arith.mulf %138, %0 : vector<2x32x256xf32>
    %140 = vector.broadcast %129 : vector<2x1x1xf32> to vector<2x32x256xf32>
    %141 = arith.mulf %140, %1 : vector<2x32x256xf32>
    %142 = arith.addf %139, %141 : vector<2x32x256xf32>
    %c0_54 = arith.constant 0 : index
    %c0_55 = arith.constant 0 : index
    %c0_56 = arith.constant 0 : index
    %c0_57 = arith.constant 0 : index
    %143 = vector.load %arg7[%c0_54, %c0_55, %c0_56, %c0_57] : memref<3x2x32x256xf32, #tpu.memory_space<vmem>>, vector<1x2x32x256xf32>
    %144 = vector.shape_cast %143 : vector<1x2x32x256xf32> to vector<2x32x256xf32>
    %145 = vector.shape_cast %142 : vector<2x32x256xf32> to vector<1x2x32x256xf32>
    tpu.vector_store %arg7[%c0_54, %c0_55, %c0_56, %c0_57], %145 {strides = array<i32>} : memref<3x2x32x256xf32, #tpu.memory_space<vmem>>, vector<1x2x32x256xf32>,
    %146 = vector.extract_strided_slice %109 {offsets = [0, 1], sizes = [2, 1], strides = [1, 1]} : vector<2x3xf32> to vector<2x1xf32>
    %147 = vector.shape_cast %146 : vector<2x1xf32> to vector<2x1x1xf32>
    %148 = vector.extract_strided_slice %113 {offsets = [0, 1], sizes = [2, 1], strides = [1, 1]} : vector<2x3xf32> to vector<2x1xf32>
    %149 = vector.shape_cast %148 : vector<2x1xf32> to vector<2x1x1xf32>
    %150 = vector.extract_strided_slice %117 {offsets = [0, 1], sizes = [2, 1], strides = [1, 1]} : vector<2x3xf32> to vector<2x1xf32>
    %151 = vector.shape_cast %150 : vector<2x1xf32> to vector<2x1x1xf32>
    %152 = vector.extract_strided_slice %121 {offsets = [0, 1], sizes = [2, 1], strides = [1, 1]} : vector<2x3xf32> to vector<2x1xf32>
    %153 = vector.shape_cast %152 : vector<2x1xf32> to vector<2x1x1xf32>
    %154 = vector.broadcast %147 : vector<2x1x1xf32> to vector<2x32x256xf32>
    %155 = arith.mulf %154, %0 : vector<2x32x256xf32>
    %156 = vector.broadcast %149 : vector<2x1x1xf32> to vector<2x32x256xf32>
    %157 = arith.mulf %156, %1 : vector<2x32x256xf32>
    %158 = arith.addf %155, %157 : vector<2x32x256xf32>
    %c1_58 = arith.constant 1 : index
    %c0_59 = arith.constant 0 : index
    %c0_60 = arith.constant 0 : index
    %c0_61 = arith.constant 0 : index
    %159 = vector.load %arg6[%c1_58, %c0_59, %c0_60, %c0_61] : memref<3x2x32x256xf32, #tpu.memory_space<vmem>>, vector<1x2x32x256xf32>
    %160 = vector.shape_cast %159 : vector<1x2x32x256xf32> to vector<2x32x256xf32>
    %161 = vector.shape_cast %158 : vector<2x32x256xf32> to vector<1x2x32x256xf32>
    tpu.vector_store %arg6[%c1_58, %c0_59, %c0_60, %c0_61], %161 {strides = array<i32>} : memref<3x2x32x256xf32, #tpu.memory_space<vmem>>, vector<1x2x32x256xf32>,
    %162 = vector.broadcast %151 : vector<2x1x1xf32> to vector<2x32x256xf32>
    %163 = arith.mulf %162, %0 : vector<2x32x256xf32>
    %164 = vector.broadcast %153 : vector<2x1x1xf32> to vector<2x32x256xf32>
    %165 = arith.mulf %164, %1 : vector<2x32x256xf32>
    %166 = arith.addf %163, %165 : vector<2x32x256xf32>
    %c1_62 = arith.constant 1 : index
    %c0_63 = arith.constant 0 : index
    %c0_64 = arith.constant 0 : index
    %c0_65 = arith.constant 0 : index
    %167 = vector.load %arg7[%c1_62, %c0_63, %c0_64, %c0_65] : memref<3x2x32x256xf32, #tpu.memory_space<vmem>>, vector<1x2x32x256xf32>
    %168 = vector.shape_cast %167 : vector<1x2x32x256xf32> to vector<2x32x256xf32>
    %169 = vector.shape_cast %166 : vector<2x32x256xf32> to vector<1x2x32x256xf32>
    tpu.vector_store %arg7[%c1_62, %c0_63, %c0_64, %c0_65], %169 {strides = array<i32>} : memref<3x2x32x256xf32, #tpu.memory_space<vmem>>, vector<1x2x32x256xf32>,
    %170 = vector.extract_strided_slice %109 {offsets = [0, 2], sizes = [2, 1], strides = [1, 1]} : vector<2x3xf32> to vector<2x1xf32>
    %171 = vector.shape_cast %170 : vector<2x1xf32> to vector<2x1x1xf32>
    %172 = vector.extract_strided_slice %113 {offsets = [0, 2], sizes = [2, 1], strides = [1, 1]} : vector<2x3xf32> to vector<2x1xf32>
    %173 = vector.shape_cast %172 : vector<2x1xf32> to vector<2x1x1xf32>
    %174 = vector.extract_strided_slice %117 {offsets = [0, 2], sizes = [2, 1], strides = [1, 1]} : vector<2x3xf32> to vector<2x1xf32>
    %175 = vector.shape_cast %174 : vector<2x1xf32> to vector<2x1x1xf32>
    %176 = vector.extract_strided_slice %121 {offsets = [0, 2], sizes = [2, 1], strides = [1, 1]} : vector<2x3xf32> to vector<2x1xf32>
    %177 = vector.shape_cast %176 : vector<2x1xf32> to vector<2x1x1xf32>
    %178 = vector.broadcast %171 : vector<2x1x1xf32> to vector<2x32x256xf32>
    %179 = arith.mulf %178, %0 : vector<2x32x256xf32>
    %180 = vector.broadcast %173 : vector<2x1x1xf32> to vector<2x32x256xf32>
    %181 = arith.mulf %180, %1 : vector<2x32x256xf32>
    %182 = arith.addf %179, %181 : vector<2x32x256xf32>
    %c2_66 = arith.constant 2 : index
    %c0_67 = arith.constant 0 : index
    %c0_68 = arith.constant 0 : index
    %c0_69 = arith.constant 0 : index
    %183 = vector.load %arg6[%c2_66, %c0_67, %c0_68, %c0_69] : memref<3x2x32x256xf32, #tpu.memory_space<vmem>>, vector<1x2x32x256xf32>
    %184 = vector.shape_cast %183 : vector<1x2x32x256xf32> to vector<2x32x256xf32>
    %185 = vector.shape_cast %182 : vector<2x32x256xf32> to vector<1x2x32x256xf32>
    tpu.vector_store %arg6[%c2_66, %c0_67, %c0_68, %c0_69], %185 {strides = array<i32>} : memref<3x2x32x256xf32, #tpu.memory_space<vmem>>, vector<1x2x32x256xf32>,
    %186 = vector.broadcast %175 : vector<2x1x1xf32> to vector<2x32x256xf32>
    %187 = arith.mulf %186, %0 : vector<2x32x256xf32>
    %188 = vector.broadcast %177 : vector<2x1x1xf32> to vector<2x32x256xf32>
    %189 = arith.mulf %188, %1 : vector<2x32x256xf32>
    %190 = arith.addf %187, %189 : vector<2x32x256xf32>
    %c2_70 = arith.constant 2 : index
    %c0_71 = arith.constant 0 : index
    %c0_72 = arith.constant 0 : index
    %c0_73 = arith.constant 0 : index
    %191 = vector.load %arg7[%c2_70, %c0_71, %c0_72, %c0_73] : memref<3x2x32x256xf32, #tpu.memory_space<vmem>>, vector<1x2x32x256xf32>
    %192 = vector.shape_cast %191 : vector<1x2x32x256xf32> to vector<2x32x256xf32>
    %193 = vector.shape_cast %190 : vector<2x32x256xf32> to vector<1x2x32x256xf32>
    tpu.vector_store %arg7[%c2_70, %c0_71, %c0_72, %c0_73], %193 {strides = array<i32>} : memref<3x2x32x256xf32, #tpu.memory_space<vmem>>, vector<1x2x32x256xf32>,
    return
  }
  func.func @transform_0(%arg0: i32) -> (i32, i32, i32) {
    %c0_i32 = arith.constant 0 : i32
    %c0_i32_0 = arith.constant 0 : i32
    %c0_i32_1 = arith.constant 0 : i32
    %c0_i32_2 = arith.constant 0 : i32
    return %c0_i32, %c0_i32_0, %c0_i32_1 : i32, i32, i32
  }
  func.func @transform_1(%arg0: i32) -> (i32, i32, i32) {
    %c0_i32 = arith.constant 0 : i32
    %c0_i32_0 = arith.constant 0 : i32
    %c0_i32_1 = arith.constant 0 : i32
    %c0_i32_2 = arith.constant 0 : i32
    return %c0_i32, %c0_i32_0, %c0_i32_1 : i32, i32, i32
  }
  func.func @transform_2(%arg0: i32) -> (i32, i32) {
    %c0_i32 = arith.constant 0 : i32
    %c0_i32_0 = arith.constant 0 : i32
    %c0_i32_1 = arith.constant 0 : i32
    return %c0_i32, %c0_i32_0 : i32, i32
  }
  func.func @transform_3(%arg0: i32) -> (i32, i32) {
    %c0_i32 = arith.constant 0 : i32
    %c0_i32_0 = arith.constant 0 : i32
    %c0_i32_1 = arith.constant 0 : i32
    return %c0_i32, %c0_i32_0 : i32, i32
  }
  func.func @transform_4(%arg0: i32) -> (i32, i32) {
    %c0_i32 = arith.constant 0 : i32
    %c0_i32_0 = arith.constant 0 : i32
    %c0_i32_1 = arith.constant 0 : i32
    return %c0_i32, %c0_i32_0 : i32, i32
  }
  func.func @transform_5(%arg0: i32) -> (i32, i32, i32, i32) {
    %c0_i32 = arith.constant 0 : i32
    %c0_i32_0 = arith.constant 0 : i32
    %c0_i32_1 = arith.constant 0 : i32
    %c0_i32_2 = arith.constant 0 : i32
    %c0_i32_3 = arith.constant 0 : i32
    return %c0_i32, %c0_i32_0, %c0_i32_1, %c0_i32_2 : i32, i32, i32, i32
  }
  func.func @transform_6(%arg0: i32) -> (i32, i32, i32, i32) {
    %c0_i32 = arith.constant 0 : i32
    %c0_i32_0 = arith.constant 0 : i32
    %c0_i32_1 = arith.constant 0 : i32
    %c0_i32_2 = arith.constant 0 : i32
    %c0_i32_3 = arith.constant 0 : i32
    return %c0_i32, %c0_i32_0, %c0_i32_1, %c0_i32_2 : i32, i32, i32, i32
  }
}

</mosaic_0001>

<llo_original>
// kernel: tpu_custom_call.1
$region0: #{tpu_custom_call.1}
  #allocation0 [shape = 'u32[]', space=smem, size = 0x4, offset = 0x4, fixed_abs, tag = 'smem constant byte address 0x4 - core index']
  #allocation1 [shape = 'u32[72,128]{1,0:T(1,128)}', space=vmem, size = 0x9000, scoped, tag = 'internal scratch']
  %s0 = inlined_call_operand.hbm [shape: f32[2,32,256], index: 0, kind: input, shape index: {}]
  %s1 = inlined_call_operand.hbm [shape: f32[2,32,256], index: 1, kind: input, shape index: {}]
  %s2 = inlined_call_operand.vmem [shape: f32[32,12], index: 2, kind: input, shape index: {}]
  %s3 = inlined_call_operand.vmem [shape: f32[1,12], index: 3, kind: input, shape index: {}]
  %s4 = inlined_call_operand.vmem [shape: f32[4,4], index: 4, kind: input, shape index: {}]
  %s5 = inlined_call_operand.hbm [shape: f32[3,2,32,256], index: 5, kind: output, shape index: {0}]
  %s6 = inlined_call_operand.hbm [shape: f32[3,2,32,256], index: 6, kind: output, shape index: {1}]
  %7 = xla_tuple %s5, %s6
  %s8 = sld [smem:[#allocation0]]
  $region50: #{tpu_custom_call.1} parent=0
    _
  %s10 = ssub.s32 1, %s8
  %s11 = scalar_select 0, %s10, %s8
  $region1: #{tpu_custom_call.1} parent=0
    #allocation2 [shape = 'u8[65536]{0}', space=vmem, size = 0x10000, scoped, tag = 'input window, operand 0, single buffered']
    #allocation3 [shape = 's32[1]{0}', space=sflag, size = 0x4, scoped, tag = 'scoped memory for tpu_custom_call.1']
    #allocation4 [shape = 's32[1]{0}', space=sflag, size = 0x4, scoped, tag = 'scoped memory for tpu_custom_call.1']
    #allocation5 [shape = 's32[1]{0}', space=sflag, size = 0x4, scoped, tag = 'scoped memory for tpu_custom_call.1']
    #allocation6 [shape = 'u8[65536]{0}', space=vmem, size = 0x10000, scoped, tag = 'input window, operand 1, single buffered']
    #allocation7 [shape = 's32[1]{0}', space=sflag, size = 0x4, scoped, tag = 'scoped memory for tpu_custom_call.1']
    #allocation8 [shape = 'u8[2048]{0}', space=smem, size = 0x800, scoped, tag = 'input window, operand 4, single buffered']
    #allocation9 [shape = 'u8[196608]{0}', space=vmem, size = 0x30000, scoped, tag = 'output window, operand 0, single buffered']
    #allocation10 [shape = 'u8[196608]{0}', space=vmem, size = 0x30000, scoped, tag = 'output window, operand 1, single buffered']
    #allocation11 [shape = 's32[1]{0}', space=sflag, size = 0x4, scoped, tag = 'scoped memory for tpu_custom_call.1']
    %12 = vsyncpa [#allocation3], 0
    %13 = vsyncpa [#allocation7], 0
    %14 = vsyncpa [#allocation5], 0
    %15 = vsyncpa [#allocation4], 0
    %16 = vsyncpa [#allocation11], 0
    // Predicated region
    $region2: #{tpu_custom_call.1} parent=1 // pred_check
      _
    $region3: #{tpu_custom_call.1} parent=1 // pred_check_branch
      %18 = sbr.rel (0) target = $region5
    $region4: #{tpu_custom_call.1} parent=1 // pred_region
      %20 = vsyncadd [#allocation3], 0
      %s21 = sshll.u32 %s0, 4
      %s22 = int_to_ptr.hbm [resolvable:$true] %s21
      %s23 = sshll.u32 [#allocation2], 4
      %s24 = int_to_ptr.vmem [resolvable:$true] %s23
      %29 = dma.hbm_to_vmem [thread:$0]  %s22, 2048, %s24, [#allocation3], 256, 256, 16
    $region5: #{tpu_custom_call.1} parent=1 // pred_fallthru
      _
    // Predicated region
    $region6: #{tpu_custom_call.1} parent=1 // pred_check
      _
    $region7: #{tpu_custom_call.1} parent=1 // pred_check_branch
      %31 = sbr.rel (0) target = $region9
    $region8: #{tpu_custom_call.1} parent=1 // pred_region
      %33 = vsyncadd [#allocation7], 0
      %s34 = sshll.u32 %s1, 4
      %s35 = int_to_ptr.hbm [resolvable:$true] %s34
      %s36 = sshll.u32 [#allocation6], 4
      %s37 = int_to_ptr.vmem [resolvable:$true] %s36
      %42 = dma.hbm_to_vmem [thread:$0]  %s35, 2048, %s37, [#allocation7], 256, 256, 16
    $region9: #{tpu_custom_call.1} parent=1 // pred_fallthru
      _
    // Predicated region
    $region10: #{tpu_custom_call.1} parent=1 // pred_check
      _
    $region11: #{tpu_custom_call.1} parent=1 // pred_check_branch
      %44 = sbr.rel (0) target = $region13
    $region12: #{tpu_custom_call.1} parent=1 // pred_region
      _
    $region13: #{tpu_custom_call.1} parent=1 // pred_fallthru
      _
    // Predicated region
    $region14: #{tpu_custom_call.1} parent=1 // pred_check
      _
    $region15: #{tpu_custom_call.1} parent=1 // pred_check_branch
      %46 = sbr.rel (0) target = $region17
    $region16: #{tpu_custom_call.1} parent=1 // pred_region
      _
    $region17: #{tpu_custom_call.1} parent=1 // pred_fallthru
      _
    // Predicated region
    $region18: #{tpu_custom_call.1} parent=1 // pred_check
      _
    $region19: #{tpu_custom_call.1} parent=1 // pred_check_branch
      %48 = sbr.rel (0) target = $region21
    $region20: #{tpu_custom_call.1} parent=1 // pred_region
      %50 = vsyncadd [#allocation5], 0
      %s52 = sshll.u32 %s4, 4
      %s53 = int_to_ptr.vmem [resolvable:$true] %s52
      %55 = dma.vmem_to_smem %s53, 64, [#allocation8], [#allocation5]
    $region21: #{tpu_custom_call.1} parent=1 // pred_fallthru
      _
    // Predicated region
    $region22: #{tpu_custom_call.1} parent=1 // pred_check
      _
    $region23: #{tpu_custom_call.1} parent=1 // pred_check_branch
      %57 = sbr.rel (0) target = $region25
    $region24: #{tpu_custom_call.1} parent=1 // pred_region
      %59 = dma.done [#allocation3], 2048
    $region25: #{tpu_custom_call.1} parent=1 // pred_fallthru
      _
    // Predicated region
    $region26: #{tpu_custom_call.1} parent=1 // pred_check
      _
    $region27: #{tpu_custom_call.1} parent=1 // pred_check_branch
      %61 = sbr.rel (0) target = $region29
    $region28: #{tpu_custom_call.1} parent=1 // pred_region
      %63 = dma.done [#allocation7], 2048
    $region29: #{tpu_custom_call.1} parent=1 // pred_fallthru
      _
    // Predicated region
    $region30: #{tpu_custom_call.1} parent=1 // pred_check
      _
    $region31: #{tpu_custom_call.1} parent=1 // pred_check_branch
      %65 = sbr.rel (0) target = $region33
    $region32: #{tpu_custom_call.1} parent=1 // pred_region
      %67 = dma.done [#allocation5], 64
    $region33: #{tpu_custom_call.1} parent=1 // pred_fallthru
      _
    %68 = sfence
    %v69 = vld [vmem:[#allocation2] sm:$0xff]
    %v70 = vld [vmem:[#allocation2 + $0x8] sm:$0xff]
    %v71 = vld [vmem:[#allocation2 + $0x10] sm:$0xff]
    %v72 = vld [vmem:[#allocation2 + $0x18] sm:$0xff]
    %v73 = vld [vmem:[#allocation2 + $0x20] sm:$0xff]
    %v74 = vld [vmem:[#allocation2 + $0x28] sm:$0xff]
    %v75 = vld [vmem:[#allocation2 + $0x30] sm:$0xff]
    %v76 = vld [vmem:[#allocation2 + $0x38] sm:$0xff]
    %v77 = vld [vmem:[#allocation2 + $0x40] sm:$0xff]
    %v78 = vld [vmem:[#allocation2 + $0x48] sm:$0xff]
    %v79 = vld [vmem:[#allocation2 + $0x50] sm:$0xff]
    %v80 = vld [vmem:[#allocation2 + $0x58] sm:$0xff]
    %v81 = vld [vmem:[#allocation2 + $0x60] sm:$0xff]
    %v82 = vld [vmem:[#allocation2 + $0x68] sm:$0xff]
    %v83 = vld [vmem:[#allocation2 + $0x70] sm:$0xff]
    %v84 = vld [vmem:[#allocation2 + $0x78] sm:$0xff]
    %v85 = vld [vmem:[#allocation6] sm:$0xff]
    %v86 = vld [vmem:[#allocation6 + $0x8] sm:$0xff]
    %v87 = vld [vmem:[#allocation6 + $0x10] sm:$0xff]
    %v88 = vld [vmem:[#allocation6 + $0x18] sm:$0xff]
    %v89 = vld [vmem:[#allocation6 + $0x20] sm:$0xff]
    %v90 = vld [vmem:[#allocation6 + $0x28] sm:$0xff]
    %v91 = vld [vmem:[#allocation6 + $0x30] sm:$0xff]
    %v92 = vld [vmem:[#allocation6 + $0x38] sm:$0xff]
    %v93 = vld [vmem:[#allocation6 + $0x40] sm:$0xff]
    %v94 = vld [vmem:[#allocation6 + $0x48] sm:$0xff]
    %v95 = vld [vmem:[#allocation6 + $0x50] sm:$0xff]
    %v96 = vld [vmem:[#allocation6 + $0x58] sm:$0xff]
    %v97 = vld [vmem:[#allocation6 + $0x60] sm:$0xff]
    %v98 = vld [vmem:[#allocation6 + $0x68] sm:$0xff]
    %v99 = vld [vmem:[#allocation6 + $0x70] sm:$0xff]
    %v100 = vld [vmem:[#allocation6 + $0x78] sm:$0xff]
    %v101 = vadd.f32 %v69, %v85
    %v102 = vadd.f32 %v70, %v86
    %v103 = vadd.f32 %v71, %v87
    %v104 = vadd.f32 %v72, %v88
    %v105 = vadd.f32 %v73, %v89
    %v106 = vadd.f32 %v74, %v90
    %v107 = vadd.f32 %v75, %v91
    %v108 = vadd.f32 %v76, %v92
    %v109 = vadd.f32 %v77, %v93
    %v110 = vadd.f32 %v78, %v94
    %v111 = vadd.f32 %v79, %v95
    %v112 = vadd.f32 %v80, %v96
    %v113 = vadd.f32 %v81, %v97
    %v114 = vadd.f32 %v82, %v98
    %v115 = vadd.f32 %v83, %v99
    %v116 = vadd.f32 %v84, %v100
    %v117 = vadd.f32 %v101, %v102
    %118 = vadd.xlane.f32.xlu0 %v117
    %v119 = vpop.xlane.xlu0 %118
    %v120 = vadd.f32 %v103, %v104
    %121 = vadd.xlane.f32.xlu0 %v120
    %v122 = vpop.xlane.xlu0 %121
    %v123 = vadd.f32 %v105, %v106
    %124 = vadd.xlane.f32.xlu0 %v123
    %v125 = vpop.xlane.xlu0 %124
    %v126 = vadd.f32 %v107, %v108
    %127 = vadd.xlane.f32.xlu0 %v126
    %v128 = vpop.xlane.xlu0 %127
    %v129 = vadd.f32 %v109, %v110
    %130 = vadd.xlane.f32.xlu0 %v129
    %v131 = vpop.xlane.xlu0 %130
    %v132 = vadd.f32 %v111, %v112
    %133 = vadd.xlane.f32.xlu0 %v132
    %v134 = vpop.xlane.xlu0 %133
    %v135 = vadd.f32 %v113, %v114
    %136 = vadd.xlane.f32.xlu0 %v135
    %v137 = vpop.xlane.xlu0 %136
    %v138 = vadd.f32 %v115, %v116
    %139 = vadd.xlane.f32.xlu0 %v138
    %v140 = vpop.xlane.xlu0 %139
    %v141 = vrcp.pop 256.0
    %v142 = vmul.f32 256.0, %v141
    %v143 = vsub.f32 1.0, %v142
    %v144 = vmul.f32 %v141, %v143
    %v145 = vadd.f32 %v141, %v144
    %vm146 = vweird.f32 %v141
    %v147 = vsel %vm146, %v141, %v145
    %v148 = vmul.f32 %v119, %v147
    %v149 = vmul.f32 %v122, %v147
    %v150 = vmul.f32 %v125, %v147
    %v151 = vmul.f32 %v128, %v147
    %v152 = vmul.f32 %v131, %v147
    %v153 = vmul.f32 %v134, %v147
    %v154 = vmul.f32 %v137, %v147
    %v155 = vmul.f32 %v140, %v147
    %v156 = vld [vmem:[%s2] sm:$0xff]
    %v157 = vld [vmem:[%s2 + $0x8] sm:$0xff]
    %v158 = vld [vmem:[%s2 + $0x10] sm:$0xff]
    %v159 = vld [vmem:[%s2 + $0x18] sm:$0xff]
    %v160 = vld [vmem:[%s3] sm:$0x1]
    %v162 = vperm.slane %v160, 0
    %v172 = vlaneseq
    %v173 = vand.u32 %v172, 127
    %v174 = vperm.slane %v148, %v173
    %v175 = vadd.s32 %v173, 4294967288
    %v176 = vperm.slane %v149, %v175
    %vm177 = vcmask 130112
    %v178 = vsel %vm177, %v176, %v174
    %v179 = vadd.s32 %v173, 4294967280
    %v180 = vperm.slane %v150, %v179
    %vm181 = vcmask 195712
    %v182 = vsel %vm181, %v180, %v178
    %v183 = vadd.s32 %v173, 4294967272
    %v184 = vperm.slane %v151, %v183
    %vm185 = vcmask 261312
    %v186 = vsel %vm185, %v184, %v182
    %v187 = vperm.slane %v152, %v173
    %v188 = vperm.slane %v153, %v175
    %v189 = vsel %vm177, %v188, %v187
    %v190 = vperm.slane %v154, %v179
    %v191 = vsel %vm181, %v190, %v189
    %v192 = vperm.slane %v155, %v183
    %v193 = vsel %vm185, %v192, %v191
    %vm194 = vcmask 1041409
    %v195 = vsel %vm194, %v193, %v186
    %vm196 = vcmask 261120
    %v197 = vsel %vm196, %v195, 0
    %199 = vmatpush.msra.mxu0 0.0
    %200 = vmatpush.msra.mxu0 0.0
    %201 = vmatpush.msra.mxu0 0.0
    %202 = vmatpush.msra.mxu0 0.0
    %203 = vmatpush.msra.mxu0 0.0
    %204 = vmatpush.msra.mxu0 0.0
    %205 = vmatpush.msra.mxu0 0.0
    %206 = vmatpush.msra.mxu0 0.0
    %207 = vmatpush.msra.mxu0 0.0
    %208 = vmatpush.msra.mxu0 0.0
    %209 = vmatpush.msra.mxu0 0.0
    %210 = vmatpush.msra.mxu0 0.0
    %211 = vmatpush.msra.mxu0 %v159
    %212 = vmatpush.msra.mxu0 %v158
    %213 = vmatpush.msra.mxu0 %v157
    %214 = vmatpush.msra.mxu0 %v156
    %215 = vmatmul.f32.gmra.mxu0 %v197
    %v216 = vpop.f32.mrf.mxu0
    %v217 = vadd.f32 %v162, %v216
    %218 = vdwg.mxu0
    %vm219 = vcmask 17408
    %v220 = vsel %vm219, %v217, -inf
    %221 = vmax.xlane.f32.xlu0 %v220
    %v222 = vpop.xlane.xlu0 %221
    %v223 = vsub.f32 %v217, %v222
    %v224 = vmul.f32 %v223, 1.442695
    %v225 = vpow.pop %v224
    %v226 = vsel %vm219, %v225, 0.0
    %227 = vadd.xlane.f32.xlu0 %v226
    %v228 = vpop.xlane.xlu0 %227
    %v229 = vrcp.pop %v228
    %v230 = vmul.f32 %v228, %v229
    %v231 = vsub.f32 1.0, %v230
    %v232 = vmul.f32 %v229, %v231
    %v233 = vadd.f32 %v229, %v232
    %vm234 = vweird.f32 %v228
    %vm235 = vweird.f32 %v229
    %vm236 = vmor %vm234, %vm235
    %v237 = vsel %vm236, %v229, %v233
    %v238 = vand.u32 2147483647, %v228
    %vm239 = vcmp.eq.f32.partialorder %v238, 8.507059e+37
    %v240 = vand.u32 %v228, 2147483648
    %v241 = vor.u32 1.1754944e-38, %v240
    %v242 = vsel %vm239, %v241, %v237
    %v243 = vmul.f32 %v225, %v242
    %vm244 = vcmask 42008
    %v245 = vsel %vm244, %v217, -inf
    %246 = vmax.xlane.f32.xlu0 %v245
    %v247 = vpop.xlane.xlu0 %246
    %v248 = vsub.f32 %v217, %v247
    %v249 = vmul.f32 %v248, 1.442695
    %v250 = vpow.pop %v249
    %252 = vrot.lane.b32.xlu0 %v250, 125
    %v253 = vpop.permute.xlu0 %252
    %v255 = vsel %vm219, %v253, 0.0
    %256 = vadd.xlane.f32.xlu0 %v255
    %v257 = vpop.xlane.xlu0 %256
    %v258 = vrcp.pop %v257
    %v259 = vmul.f32 %v257, %v258
    %v260 = vsub.f32 1.0, %v259
    %v261 = vmul.f32 %v258, %v260
    %v262 = vadd.f32 %v258, %v261
    %vm263 = vweird.f32 %v257
    %vm264 = vweird.f32 %v258
    %vm265 = vmor %vm263, %vm264
    %v266 = vsel %vm265, %v258, %v262
    %v267 = vand.u32 2147483647, %v257
    %vm268 = vcmp.eq.f32.partialorder %v267, 8.507059e+37
    %v269 = vand.u32 %v257, 2147483648
    %v270 = vor.u32 1.1754944e-38, %v269
    %v271 = vsel %vm268, %v270, %v266
    %v272 = vmul.f32 %v250, %v271
    %vm273 = vcmask 66608
    %v274 = vsel %vm273, %v217, -inf
    %275 = vmax.xlane.f32.xlu0 %v274
    %v276 = vpop.xlane.xlu0 %275
    %v277 = vsub.f32 %v217, %v276
    %v278 = vmul.f32 %v277, 1.442695
    %v279 = vpow.pop %v278
    %281 = vrot.lane.b32.xlu0 %v279, 122
    %v282 = vpop.permute.xlu0 %281
    %v284 = vsel %vm219, %v282, 0.0
    %285 = vadd.xlane.f32.xlu0 %v284
    %v286 = vpop.xlane.xlu0 %285
    %v287 = vrcp.pop %v286
    %v288 = vmul.f32 %v286, %v287
    %v289 = vsub.f32 1.0, %v288
    %v290 = vmul.f32 %v287, %v289
    %v291 = vadd.f32 %v287, %v290
    %vm292 = vweird.f32 %v286
    %vm293 = vweird.f32 %v287
    %vm294 = vmor %vm292, %vm293
    %v295 = vsel %vm294, %v287, %v291
    %v296 = vand.u32 2147483647, %v286
    %vm297 = vcmp.eq.f32.partialorder %v296, 8.507059e+37
    %v298 = vand.u32 %v286, 2147483648
    %v299 = vor.u32 1.1754944e-38, %v298
    %v300 = vsel %vm297, %v299, %v295
    %v301 = vmul.f32 %v279, %v300
    %vm302 = vcmask 91208
    %v303 = vsel %vm302, %v217, -inf
    %304 = vmax.xlane.f32.xlu0 %v303
    %v305 = vpop.xlane.xlu0 %304
    %v306 = vsub.f32 %v217, %v305
    %v307 = vmul.f32 %v306, 1.442695
    %v308 = vpow.pop %v307
    %310 = vrot.lane.b32.xlu0 %v308, 119
    %v311 = vpop.permute.xlu0 %310
    %v313 = vsel %vm219, %v311, 0.0
    %314 = vadd.xlane.f32.xlu0 %v313
    %v315 = vpop.xlane.xlu0 %314
    %v316 = vrcp.pop %v315
    %v317 = vmul.f32 %v315, %v316
    %v318 = vsub.f32 1.0, %v317
    %v319 = vmul.f32 %v316, %v318
    %v320 = vadd.f32 %v316, %v319
    %vm321 = vweird.f32 %v315
    %vm322 = vweird.f32 %v316
    %vm323 = vmor %vm321, %vm322
    %v324 = vsel %vm323, %v316, %v320
    %v325 = vand.u32 2147483647, %v315
    %vm326 = vcmp.eq.f32.partialorder %v325, 8.507059e+37
    %v327 = vand.u32 %v315, 2147483648
    %v328 = vor.u32 1.1754944e-38, %v327
    %v329 = vsel %vm326, %v328, %v324
    %v330 = vmul.f32 %v308, %v329
    %332 = vrot.lane.b32.xlu0 %v272, 125
    %v333 = vpop.permute.xlu0 %332
    %v335 = vadd.f32 %v243, %v333
    %337 = vrot.lane.b32.xlu0 %v301, 122
    %v338 = vpop.permute.xlu0 %337
    %v340 = vadd.f32 %v335, %v338
    %342 = vrot.lane.b32.xlu0 %v330, 119
    %v343 = vpop.permute.xlu0 %342
    %v345 = vadd.f32 %v340, %v343
    %v346 = vadd.f32 %v345, 1e-08
    %v347 = vrcp.pop %v346
    %v348 = vmul.f32 %v346, %v347
    %v349 = vsub.f32 1.0, %v348
    %v350 = vmul.f32 %v347, %v349
    %v351 = vadd.f32 %v347, %v350
    %vm352 = vweird.f32 %v346
    %vm353 = vweird.f32 %v347
    %vm354 = vmor %vm352, %vm353
    %v355 = vsel %vm354, %v347, %v351
    %v356 = vand.u32 2147483647, %v346
    %vm357 = vcmp.eq.f32.partialorder %v356, 8.507059e+37
    %v358 = vand.u32 %v346, 2147483648
    %v359 = vor.u32 1.1754944e-38, %v358
    %v360 = vsel %vm357, %v359, %v355
    %v361 = vmul.f32 1.0, %v360
    %v362 = vmul.f32 %v243, %v361
    %s363 = sld [smem:[#allocation8]]
    %v364 = vstv %s363
    %v365 = vmul.f32 %v362, %v364
    %s366 = sld [smem:[#allocation8 + $0x1]]
    %v367 = vstv %s366
    %v368 = vmul.f32 %v362, %v367
    %s369 = sld [smem:[#allocation8 + $0x2]]
    %v370 = vstv %s369
    %v371 = vmul.f32 %v362, %v370
    %s372 = sld [smem:[#allocation8 + $0x3]]
    %v373 = vstv %s372
    %v374 = vmul.f32 %v362, %v373
    %376 = vrot.lane.b32.xlu0 %v361, 3
    %v377 = vpop.permute.xlu0 %376
    %v379 = vmul.f32 %v272, %v377
    %s380 = sld [smem:[#allocation8 + $0x80]]
    %v381 = vstv %s380
    %v382 = vmul.f32 %v379, %v381
    %384 = vrot.lane.b32.xlu0 %v382, 125
    %v385 = vpop.permute.xlu0 %384
    %v387 = vadd.f32 %v365, %v385
    %s388 = sld [smem:[#allocation8 + $0x81]]
    %v389 = vstv %s388
    %v390 = vmul.f32 %v379, %v389
    %392 = vrot.lane.b32.xlu0 %v390, 125
    %v393 = vpop.permute.xlu0 %392
    %v395 = vadd.f32 %v368, %v393
    %s396 = sld [smem:[#allocation8 + $0x82]]
    %v397 = vstv %s396
    %v398 = vmul.f32 %v379, %v397
    %400 = vrot.lane.b32.xlu0 %v398, 125
    %v401 = vpop.permute.xlu0 %400
    %v403 = vadd.f32 %v371, %v401
    %s404 = sld [smem:[#allocation8 + $0x83]]
    %v405 = vstv %s404
    %v406 = vmul.f32 %v379, %v405
    %408 = vrot.lane.b32.xlu0 %v406, 125
    %v409 = vpop.permute.xlu0 %408
    %v411 = vadd.f32 %v374, %v409
    %412 = vrot.lane.b32.xlu0 %v361, 6
    %v413 = vpop.permute.xlu0 %412
    %v415 = vmul.f32 %v301, %v413
    %s416 = sld [smem:[#allocation8 + $0x100]]
    %v417 = vstv %s416
    %v418 = vmul.f32 %v415, %v417
    %420 = vrot.lane.b32.xlu0 %v418, 122
    %v421 = vpop.permute.xlu0 %420
    %v423 = vadd.f32 %v387, %v421
    %s424 = sld [smem:[#allocation8 + $0x101]]
    %v425 = vstv %s424
    %v426 = vmul.f32 %v415, %v425
    %428 = vrot.lane.b32.xlu0 %v426, 122
    %v429 = vpop.permute.xlu0 %428
    %v431 = vadd.f32 %v395, %v429
    %s432 = sld [smem:[#allocation8 + $0x102]]
    %v433 = vstv %s432
    %v434 = vmul.f32 %v415, %v433
    %436 = vrot.lane.b32.xlu0 %v434, 122
    %v437 = vpop.permute.xlu0 %436
    %v439 = vadd.f32 %v403, %v437
    %s440 = sld [smem:[#allocation8 + $0x103]]
    %v441 = vstv %s440
    %v442 = vmul.f32 %v415, %v441
    %444 = vrot.lane.b32.xlu0 %v442, 122
    %v445 = vpop.permute.xlu0 %444
    %v447 = vadd.f32 %v411, %v445
    %448 = vrot.lane.b32.xlu0 %v361, 9
    %v449 = vpop.permute.xlu0 %448
    %v451 = vmul.f32 %v330, %v449
    %s452 = sld [smem:[#allocation8 + $0x180]]
    %v453 = vstv %s452
    %v454 = vmul.f32 %v451, %v453
    %456 = vrot.lane.b32.xlu0 %v454, 119
    %v457 = vpop.permute.xlu0 %456
    %v459 = vadd.f32 %v423, %v457
    %s460 = sld [smem:[#allocation8 + $0x181]]
    %v461 = vstv %s460
    %v462 = vmul.f32 %v451, %v461
    %464 = vrot.lane.b32.xlu0 %v462, 119
    %v465 = vpop.permute.xlu0 %464
    %v467 = vadd.f32 %v431, %v465
    %s468 = sld [smem:[#allocation8 + $0x182]]
    %v469 = vstv %s468
    %v470 = vmul.f32 %v451, %v469
    %472 = vrot.lane.b32.xlu0 %v470, 119
    %v473 = vpop.permute.xlu0 %472
    %v475 = vadd.f32 %v439, %v473
    %s476 = sld [smem:[#allocation8 + $0x183]]
    %v477 = vstv %s476
    %v478 = vmul.f32 %v451, %v477
    %480 = vrot.lane.b32.xlu0 %v478, 119
    %v481 = vpop.permute.xlu0 %480
    %v483 = vadd.f32 %v447, %v481
    %v485 = vrot.slane %v459, 1
    %v487 = vrot.slane %v467, 1
    %v489 = vrot.slane %v475, 1
    %v491 = vrot.slane %v483, 1
    %v492 = vperm.slane %v459, 0
    %v493 = vperm.slane %v485, 0
    %494 = vset.pattern.permute.xlu0 0
    %495 = vperm.xlu0 %494, %v492
    %v496 = vpop.permute.xlu0 %495
    %498 = vset.pattern.permute.xlu0 0
    %499 = vperm.xlu0 %498, %v493
    %v500 = vpop.permute.xlu0 %499
    %v502 = vmul.f32 %v496, %v69
    %v503 = vmul.f32 %v496, %v70
    %v504 = vmul.f32 %v496, %v71
    %v505 = vmul.f32 %v496, %v72
    %v506 = vmul.f32 %v496, %v73
    %v507 = vmul.f32 %v496, %v74
    %v508 = vmul.f32 %v496, %v75
    %v509 = vmul.f32 %v496, %v76
    %v510 = vmul.f32 %v500, %v77
    %v511 = vmul.f32 %v500, %v78
    %v512 = vmul.f32 %v500, %v79
    %v513 = vmul.f32 %v500, %v80
    %v514 = vmul.f32 %v500, %v81
    %v515 = vmul.f32 %v500, %v82
    %v516 = vmul.f32 %v500, %v83
    %v517 = vmul.f32 %v500, %v84
    %v518 = vperm.slane %v467, 0
    %v519 = vperm.slane %v487, 0
    %520 = vset.pattern.permute.xlu0 0
    %521 = vperm.xlu0 %520, %v518
    %v522 = vpop.permute.xlu0 %521
    %524 = vset.pattern.permute.xlu0 0
    %525 = vperm.xlu0 %524, %v519
    %v526 = vpop.permute.xlu0 %525
    %v528 = vmul.f32 %v522, %v85
    %v529 = vmul.f32 %v522, %v86
    %v530 = vmul.f32 %v522, %v87
    %v531 = vmul.f32 %v522, %v88
    %v532 = vmul.f32 %v522, %v89
    %v533 = vmul.f32 %v522, %v90
    %v534 = vmul.f32 %v522, %v91
    %v535 = vmul.f32 %v522, %v92
    %v536 = vmul.f32 %v526, %v93
    %v537 = vmul.f32 %v526, %v94
    %v538 = vmul.f32 %v526, %v95
    %v539 = vmul.f32 %v526, %v96
    %v540 = vmul.f32 %v526, %v97
    %v541 = vmul.f32 %v526, %v98
    %v542 = vmul.f32 %v526, %v99
    %v543 = vmul.f32 %v526, %v100
    %v544 = vadd.f32 %v502, %v528
    %v545 = vadd.f32 %v503, %v529
    %v546 = vadd.f32 %v504, %v530
    %v547 = vadd.f32 %v505, %v531
    %v548 = vadd.f32 %v506, %v532
    %v549 = vadd.f32 %v507, %v533
    %v550 = vadd.f32 %v508, %v534
    %v551 = vadd.f32 %v509, %v535
    %v552 = vadd.f32 %v510, %v536
    %v553 = vadd.f32 %v511, %v537
    %v554 = vadd.f32 %v512, %v538
    %v555 = vadd.f32 %v513, %v539
    %v556 = vadd.f32 %v514, %v540
    %v557 = vadd.f32 %v515, %v541
    %v558 = vadd.f32 %v516, %v542
    %v559 = vadd.f32 %v517, %v543
    %560 = vst [vmem:[#allocation9] sm:$0xff] %v544
    %561 = vst [vmem:[#allocation9 + $0x8] sm:$0xff] %v545
    %562 = vst [vmem:[#allocation9 + $0x10] sm:$0xff] %v546
    %563 = vst [vmem:[#allocation9 + $0x18] sm:$0xff] %v547
    %564 = vst [vmem:[#allocation9 + $0x20] sm:$0xff] %v548
    %565 = vst [vmem:[#allocation9 + $0x28] sm:$0xff] %v549
    %566 = vst [vmem:[#allocation9 + $0x30] sm:$0xff] %v550
    %567 = vst [vmem:[#allocation9 + $0x38] sm:$0xff] %v551
    %568 = vst [vmem:[#allocation9 + $0x40] sm:$0xff] %v552
    %569 = vst [vmem:[#allocation9 + $0x48] sm:$0xff] %v553
    %570 = vst [vmem:[#allocation9 + $0x50] sm:$0xff] %v554
    %571 = vst [vmem:[#allocation9 + $0x58] sm:$0xff] %v555
    %572 = vst [vmem:[#allocation9 + $0x60] sm:$0xff] %v556
    %573 = vst [vmem:[#allocation9 + $0x68] sm:$0xff] %v557
    %574 = vst [vmem:[#allocation9 + $0x70] sm:$0xff] %v558
    %575 = vst [vmem:[#allocation9 + $0x78] sm:$0xff] %v559
    %v576 = vperm.slane %v475, 0
    %v577 = vperm.slane %v489, 0
    %578 = vset.pattern.permute.xlu0 0
    %579 = vperm.xlu0 %578, %v576
    %v580 = vpop.permute.xlu0 %579
    %582 = vset.pattern.permute.xlu0 0
    %583 = vperm.xlu0 %582, %v577
    %v584 = vpop.permute.xlu0 %583
    %v586 = vmul.f32 %v580, %v69
    %v587 = vmul.f32 %v580, %v70
    %v588 = vmul.f32 %v580, %v71
    %v589 = vmul.f32 %v580, %v72
    %v590 = vmul.f32 %v580, %v73
    %v591 = vmul.f32 %v580, %v74
    %v592 = vmul.f32 %v580, %v75
    %v593 = vmul.f32 %v580, %v76
    %v594 = vmul.f32 %v584, %v77
    %v595 = vmul.f32 %v584, %v78
    %v596 = vmul.f32 %v584, %v79
    %v597 = vmul.f32 %v584, %v80
    %v598 = vmul.f32 %v584, %v81
    %v599 = vmul.f32 %v584, %v82
    %v600 = vmul.f32 %v584, %v83
    %v601 = vmul.f32 %v584, %v84
    %v602 = vperm.slane %v483, 0
    %v603 = vperm.slane %v491, 0
    %604 = vset.pattern.permute.xlu0 0
    %605 = vperm.xlu0 %604, %v602
    %v606 = vpop.permute.xlu0 %605
    %608 = vset.pattern.permute.xlu0 0
    %609 = vperm.xlu0 %608, %v603
    %v610 = vpop.permute.xlu0 %609
    %v612 = vmul.f32 %v606, %v85
    %v613 = vmul.f32 %v606, %v86
    %v614 = vmul.f32 %v606, %v87
    %v615 = vmul.f32 %v606, %v88
    %v616 = vmul.f32 %v606, %v89
    %v617 = vmul.f32 %v606, %v90
    %v618 = vmul.f32 %v606, %v91
    %v619 = vmul.f32 %v606, %v92
    %v620 = vmul.f32 %v610, %v93
    %v621 = vmul.f32 %v610, %v94
    %v622 = vmul.f32 %v610, %v95
    %v623 = vmul.f32 %v610, %v96
    %v624 = vmul.f32 %v610, %v97
    %v625 = vmul.f32 %v610, %v98
    %v626 = vmul.f32 %v610, %v99
    %v627 = vmul.f32 %v610, %v100
    %v628 = vadd.f32 %v586, %v612
    %v629 = vadd.f32 %v587, %v613
    %v630 = vadd.f32 %v588, %v614
    %v631 = vadd.f32 %v589, %v615
    %v632 = vadd.f32 %v590, %v616
    %v633 = vadd.f32 %v591, %v617
    %v634 = vadd.f32 %v592, %v618
    %v635 = vadd.f32 %v593, %v619
    %v636 = vadd.f32 %v594, %v620
    %v637 = vadd.f32 %v595, %v621
    %v638 = vadd.f32 %v596, %v622
    %v639 = vadd.f32 %v597, %v623
    %v640 = vadd.f32 %v598, %v624
    %v641 = vadd.f32 %v599, %v625
    %v642 = vadd.f32 %v600, %v626
    %v643 = vadd.f32 %v601, %v627
    %644 = vst [vmem:[#allocation10] sm:$0xff] %v628
    %645 = vst [vmem:[#allocation10 + $0x8] sm:$0xff] %v629
    %646 = vst [vmem:[#allocation10 + $0x10] sm:$0xff] %v630
    %647 = vst [vmem:[#allocation10 + $0x18] sm:$0xff] %v631
    %648 = vst [vmem:[#allocation10 + $0x20] sm:$0xff] %v632
    %649 = vst [vmem:[#allocation10 + $0x28] sm:$0xff] %v633
    %650 = vst [vmem:[#allocation10 + $0x30] sm:$0xff] %v634
    %651 = vst [vmem:[#allocation10 + $0x38] sm:$0xff] %v635
    %652 = vst [vmem:[#allocation10 + $0x40] sm:$0xff] %v636
    %653 = vst [vmem:[#allocation10 + $0x48] sm:$0xff] %v637
    %654 = vst [vmem:[#allocation10 + $0x50] sm:$0xff] %v638
    %655 = vst [vmem:[#allocation10 + $0x58] sm:$0xff] %v639
    %656 = vst [vmem:[#allocation10 + $0x60] sm:$0xff] %v640
    %657 = vst [vmem:[#allocation10 + $0x68] sm:$0xff] %v641
    %658 = vst [vmem:[#allocation10 + $0x70] sm:$0xff] %v642
    %659 = vst [vmem:[#allocation10 + $0x78] sm:$0xff] %v643
    %660 = vset.pattern.permute.xlu0 1
    %661 = vperm.xlu0 %660, %v492
    %v662 = vpop.permute.xlu0 %661
    %664 = vset.pattern.permute.xlu0 1
    %665 = vperm.xlu0 %664, %v493
    %v666 = vpop.permute.xlu0 %665
    %v668 = vmul.f32 %v662, %v69
    %v669 = vmul.f32 %v662, %v70
    %v670 = vmul.f32 %v662, %v71
    %v671 = vmul.f32 %v662, %v72
    %v672 = vmul.f32 %v662, %v73
    %v673 = vmul.f32 %v662, %v74
    %v674 = vmul.f32 %v662, %v75
    %v675 = vmul.f32 %v662, %v76
    %v676 = vmul.f32 %v666, %v77
    %v677 = vmul.f32 %v666, %v78
    %v678 = vmul.f32 %v666, %v79
    %v679 = vmul.f32 %v666, %v80
    %v680 = vmul.f32 %v666, %v81
    %v681 = vmul.f32 %v666, %v82
    %v682 = vmul.f32 %v666, %v83
    %v683 = vmul.f32 %v666, %v84
    %684 = vset.pattern.permute.xlu0 1
    %685 = vperm.xlu0 %684, %v518
    %v686 = vpop.permute.xlu0 %685
    %688 = vset.pattern.permute.xlu0 1
    %689 = vperm.xlu0 %688, %v519
    %v690 = vpop.permute.xlu0 %689
    %v692 = vmul.f32 %v686, %v85
    %v693 = vmul.f32 %v686, %v86
    %v694 = vmul.f32 %v686, %v87
    %v695 = vmul.f32 %v686, %v88
    %v696 = vmul.f32 %v686, %v89
    %v697 = vmul.f32 %v686, %v90
    %v698 = vmul.f32 %v686, %v91
    %v699 = vmul.f32 %v686, %v92
    %v700 = vmul.f32 %v690, %v93
    %v701 = vmul.f32 %v690, %v94
    %v702 = vmul.f32 %v690, %v95
    %v703 = vmul.f32 %v690, %v96
    %v704 = vmul.f32 %v690, %v97
    %v705 = vmul.f32 %v690, %v98
    %v706 = vmul.f32 %v690, %v99
    %v707 = vmul.f32 %v690, %v100
    %v708 = vadd.f32 %v668, %v692
    %v709 = vadd.f32 %v669, %v693
    %v710 = vadd.f32 %v670, %v694
    %v711 = vadd.f32 %v671, %v695
    %v712 = vadd.f32 %v672, %v696
    %v713 = vadd.f32 %v673, %v697
    %v714 = vadd.f32 %v674, %v698
    %v715 = vadd.f32 %v675, %v699
    %v716 = vadd.f32 %v676, %v700
    %v717 = vadd.f32 %v677, %v701
    %v718 = vadd.f32 %v678, %v702
    %v719 = vadd.f32 %v679, %v703
    %v720 = vadd.f32 %v680, %v704
    %v721 = vadd.f32 %v681, %v705
    %v722 = vadd.f32 %v682, %v706
    %v723 = vadd.f32 %v683, %v707
    %s724 = scalar_lea.vmem [#allocation9], 128
    %725 = vst [vmem:[%s724] sm:$0xff] %v708
    %726 = vst [vmem:[%s724 + $0x8] sm:$0xff] %v709
    %727 = vst [vmem:[%s724 + $0x10] sm:$0xff] %v710
    %728 = vst [vmem:[%s724 + $0x18] sm:$0xff] %v711
    %729 = vst [vmem:[%s724 + $0x20] sm:$0xff] %v712
    %730 = vst [vmem:[%s724 + $0x28] sm:$0xff] %v713
    %731 = vst [vmem:[%s724 + $0x30] sm:$0xff] %v714
    %732 = vst [vmem:[%s724 + $0x38] sm:$0xff] %v715
    %733 = vst [vmem:[%s724 + $0x40] sm:$0xff] %v716
    %734 = vst [vmem:[%s724 + $0x48] sm:$0xff] %v717
    %735 = vst [vmem:[%s724 + $0x50] sm:$0xff] %v718
    %736 = vst [vmem:[%s724 + $0x58] sm:$0xff] %v719
    %737 = vst [vmem:[%s724 + $0x60] sm:$0xff] %v720
    %738 = vst [vmem:[%s724 + $0x68] sm:$0xff] %v721
    %739 = vst [vmem:[%s724 + $0x70] sm:$0xff] %v722
    %740 = vst [vmem:[%s724 + $0x78] sm:$0xff] %v723
    %741 = vset.pattern.permute.xlu0 1
    %742 = vperm.xlu0 %741, %v576
    %v743 = vpop.permute.xlu0 %742
    %745 = vset.pattern.permute.xlu0 1
    %746 = vperm.xlu0 %745, %v577
    %v747 = vpop.permute.xlu0 %746
    %v749 = vmul.f32 %v743, %v69
    %v750 = vmul.f32 %v743, %v70
    %v751 = vmul.f32 %v743, %v71
    %v752 = vmul.f32 %v743, %v72
    %v753 = vmul.f32 %v743, %v73
    %v754 = vmul.f32 %v743, %v74
    %v755 = vmul.f32 %v743, %v75
    %v756 = vmul.f32 %v743, %v76
    %v757 = vmul.f32 %v747, %v77
    %v758 = vmul.f32 %v747, %v78
    %v759 = vmul.f32 %v747, %v79
    %v760 = vmul.f32 %v747, %v80
    %v761 = vmul.f32 %v747, %v81
    %v762 = vmul.f32 %v747, %v82
    %v763 = vmul.f32 %v747, %v83
    %v764 = vmul.f32 %v747, %v84
    %765 = vset.pattern.permute.xlu0 1
    %766 = vperm.xlu0 %765, %v602
    %v767 = vpop.permute.xlu0 %766
    %769 = vset.pattern.permute.xlu0 1
    %770 = vperm.xlu0 %769, %v603
    %v771 = vpop.permute.xlu0 %770
    %v773 = vmul.f32 %v767, %v85
    %v774 = vmul.f32 %v767, %v86
    %v775 = vmul.f32 %v767, %v87
    %v776 = vmul.f32 %v767, %v88
    %v777 = vmul.f32 %v767, %v89
    %v778 = vmul.f32 %v767, %v90
    %v779 = vmul.f32 %v767, %v91
    %v780 = vmul.f32 %v767, %v92
    %v781 = vmul.f32 %v771, %v93
    %v782 = vmul.f32 %v771, %v94
    %v783 = vmul.f32 %v771, %v95
    %v784 = vmul.f32 %v771, %v96
    %v785 = vmul.f32 %v771, %v97
    %v786 = vmul.f32 %v771, %v98
    %v787 = vmul.f32 %v771, %v99
    %v788 = vmul.f32 %v771, %v100
    %v789 = vadd.f32 %v749, %v773
    %v790 = vadd.f32 %v750, %v774
    %v791 = vadd.f32 %v751, %v775
    %v792 = vadd.f32 %v752, %v776
    %v793 = vadd.f32 %v753, %v777
    %v794 = vadd.f32 %v754, %v778
    %v795 = vadd.f32 %v755, %v779
    %v796 = vadd.f32 %v756, %v780
    %v797 = vadd.f32 %v757, %v781
    %v798 = vadd.f32 %v758, %v782
    %v799 = vadd.f32 %v759, %v783
    %v800 = vadd.f32 %v760, %v784
    %v801 = vadd.f32 %v761, %v785
    %v802 = vadd.f32 %v762, %v786
    %v803 = vadd.f32 %v763, %v787
    %v804 = vadd.f32 %v764, %v788
    %s805 = scalar_lea.vmem [#allocation10], 128
    %806 = vst [vmem:[%s805] sm:$0xff] %v789
    %807 = vst [vmem:[%s805 + $0x8] sm:$0xff] %v790
    %808 = vst [vmem:[%s805 + $0x10] sm:$0xff] %v791
    %809 = vst [vmem:[%s805 + $0x18] sm:$0xff] %v792
    %810 = vst [vmem:[%s805 + $0x20] sm:$0xff] %v793
    %811 = vst [vmem:[%s805 + $0x28] sm:$0xff] %v794
    %812 = vst [vmem:[%s805 + $0x30] sm:$0xff] %v795
    %813 = vst [vmem:[%s805 + $0x38] sm:$0xff] %v796
    %814 = vst [vmem:[%s805 + $0x40] sm:$0xff] %v797
    %815 = vst [vmem:[%s805 + $0x48] sm:$0xff] %v798
    %816 = vst [vmem:[%s805 + $0x50] sm:$0xff] %v799
    %817 = vst [vmem:[%s805 + $0x58] sm:$0xff] %v800
    %818 = vst [vmem:[%s805 + $0x60] sm:$0xff] %v801
    %819 = vst [vmem:[%s805 + $0x68] sm:$0xff] %v802
    %820 = vst [vmem:[%s805 + $0x70] sm:$0xff] %v803
    %821 = vst [vmem:[%s805 + $0x78] sm:$0xff] %v804
    %822 = vset.pattern.permute.xlu0 2
    %823 = vperm.xlu0 %822, %v492
    %v824 = vpop.permute.xlu0 %823
    %826 = vset.pattern.permute.xlu0 2
    %827 = vperm.xlu0 %826, %v493
    %v828 = vpop.permute.xlu0 %827
    %v830 = vmul.f32 %v824, %v69
    %v831 = vmul.f32 %v824, %v70
    %v832 = vmul.f32 %v824, %v71
    %v833 = vmul.f32 %v824, %v72
    %v834 = vmul.f32 %v824, %v73
    %v835 = vmul.f32 %v824, %v74
    %v836 = vmul.f32 %v824, %v75
    %v837 = vmul.f32 %v824, %v76
    %v838 = vmul.f32 %v828, %v77
    %v839 = vmul.f32 %v828, %v78
    %v840 = vmul.f32 %v828, %v79
    %v841 = vmul.f32 %v828, %v80
    %v842 = vmul.f32 %v828, %v81
    %v843 = vmul.f32 %v828, %v82
    %v844 = vmul.f32 %v828, %v83
    %v845 = vmul.f32 %v828, %v84
    %846 = vset.pattern.permute.xlu0 2
    %847 = vperm.xlu0 %846, %v518
    %v848 = vpop.permute.xlu0 %847
    %850 = vset.pattern.permute.xlu0 2
    %851 = vperm.xlu0 %850, %v519
    %v852 = vpop.permute.xlu0 %851
    %v854 = vmul.f32 %v848, %v85
    %v855 = vmul.f32 %v848, %v86
    %v856 = vmul.f32 %v848, %v87
    %v857 = vmul.f32 %v848, %v88
    %v858 = vmul.f32 %v848, %v89
    %v859 = vmul.f32 %v848, %v90
    %v860 = vmul.f32 %v848, %v91
    %v861 = vmul.f32 %v848, %v92
    %v862 = vmul.f32 %v852, %v93
    %v863 = vmul.f32 %v852, %v94
    %v864 = vmul.f32 %v852, %v95
    %v865 = vmul.f32 %v852, %v96
    %v866 = vmul.f32 %v852, %v97
    %v867 = vmul.f32 %v852, %v98
    %v868 = vmul.f32 %v852, %v99
    %v869 = vmul.f32 %v852, %v100
    %v870 = vadd.f32 %v830, %v854
    %v871 = vadd.f32 %v831, %v855
    %v872 = vadd.f32 %v832, %v856
    %v873 = vadd.f32 %v833, %v857
    %v874 = vadd.f32 %v834, %v858
    %v875 = vadd.f32 %v835, %v859
    %v876 = vadd.f32 %v836, %v860
    %v877 = vadd.f32 %v837, %v861
    %v878 = vadd.f32 %v838, %v862
    %v879 = vadd.f32 %v839, %v863
    %v880 = vadd.f32 %v840, %v864
    %v881 = vadd.f32 %v841, %v865
    %v882 = vadd.f32 %v842, %v866
    %v883 = vadd.f32 %v843, %v867
    %v884 = vadd.f32 %v844, %v868
    %v885 = vadd.f32 %v845, %v869
    %s886 = scalar_lea.vmem [#allocation9], 256
    %887 = vst [vmem:[%s886] sm:$0xff] %v870
    %888 = vst [vmem:[%s886 + $0x8] sm:$0xff] %v871
    %889 = vst [vmem:[%s886 + $0x10] sm:$0xff] %v872
    %890 = vst [vmem:[%s886 + $0x18] sm:$0xff] %v873
    %891 = vst [vmem:[%s886 + $0x20] sm:$0xff] %v874
    %892 = vst [vmem:[%s886 + $0x28] sm:$0xff] %v875
    %893 = vst [vmem:[%s886 + $0x30] sm:$0xff] %v876
    %894 = vst [vmem:[%s886 + $0x38] sm:$0xff] %v877
    %895 = vst [vmem:[%s886 + $0x40] sm:$0xff] %v878
    %896 = vst [vmem:[%s886 + $0x48] sm:$0xff] %v879
    %897 = vst [vmem:[%s886 + $0x50] sm:$0xff] %v880
    %898 = vst [vmem:[%s886 + $0x58] sm:$0xff] %v881
    %899 = vst [vmem:[%s886 + $0x60] sm:$0xff] %v882
    %900 = vst [vmem:[%s886 + $0x68] sm:$0xff] %v883
    %901 = vst [vmem:[%s886 + $0x70] sm:$0xff] %v884
    %902 = vst [vmem:[%s886 + $0x78] sm:$0xff] %v885
    %903 = vset.pattern.permute.xlu0 2
    %904 = vperm.xlu0 %903, %v576
    %v905 = vpop.permute.xlu0 %904
    %907 = vset.pattern.permute.xlu0 2
    %908 = vperm.xlu0 %907, %v577
    %v909 = vpop.permute.xlu0 %908
    %v911 = vmul.f32 %v905, %v69
    %v912 = vmul.f32 %v905, %v70
    %v913 = vmul.f32 %v905, %v71
    %v914 = vmul.f32 %v905, %v72
    %v915 = vmul.f32 %v905, %v73
    %v916 = vmul.f32 %v905, %v74
    %v917 = vmul.f32 %v905, %v75
    %v918 = vmul.f32 %v905, %v76
    %v919 = vmul.f32 %v909, %v77
    %v920 = vmul.f32 %v909, %v78
    %v921 = vmul.f32 %v909, %v79
    %v922 = vmul.f32 %v909, %v80
    %v923 = vmul.f32 %v909, %v81
    %v924 = vmul.f32 %v909, %v82
    %v925 = vmul.f32 %v909, %v83
    %v926 = vmul.f32 %v909, %v84
    %927 = vset.pattern.permute.xlu0 2
    %928 = vperm.xlu0 %927, %v602
    %v929 = vpop.permute.xlu0 %928
    %931 = vset.pattern.permute.xlu0 2
    %932 = vperm.xlu0 %931, %v603
    %v933 = vpop.permute.xlu0 %932
    %v935 = vmul.f32 %v929, %v85
    %v936 = vmul.f32 %v929, %v86
    %v937 = vmul.f32 %v929, %v87
    %v938 = vmul.f32 %v929, %v88
    %v939 = vmul.f32 %v929, %v89
    %v940 = vmul.f32 %v929, %v90
    %v941 = vmul.f32 %v929, %v91
    %v942 = vmul.f32 %v929, %v92
    %v943 = vmul.f32 %v933, %v93
    %v944 = vmul.f32 %v933, %v94
    %v945 = vmul.f32 %v933, %v95
    %v946 = vmul.f32 %v933, %v96
    %v947 = vmul.f32 %v933, %v97
    %v948 = vmul.f32 %v933, %v98
    %v949 = vmul.f32 %v933, %v99
    %v950 = vmul.f32 %v933, %v100
    %v951 = vadd.f32 %v911, %v935
    %v952 = vadd.f32 %v912, %v936
    %v953 = vadd.f32 %v913, %v937
    %v954 = vadd.f32 %v914, %v938
    %v955 = vadd.f32 %v915, %v939
    %v956 = vadd.f32 %v916, %v940
    %v957 = vadd.f32 %v917, %v941
    %v958 = vadd.f32 %v918, %v942
    %v959 = vadd.f32 %v919, %v943
    %v960 = vadd.f32 %v920, %v944
    %v961 = vadd.f32 %v921, %v945
    %v962 = vadd.f32 %v922, %v946
    %v963 = vadd.f32 %v923, %v947
    %v964 = vadd.f32 %v924, %v948
    %v965 = vadd.f32 %v925, %v949
    %v966 = vadd.f32 %v926, %v950
    %s967 = scalar_lea.vmem [#allocation10], 256
    %968 = vst [vmem:[%s967] sm:$0xff] %v951
    %969 = vst [vmem:[%s967 + $0x8] sm:$0xff] %v952
    %970 = vst [vmem:[%s967 + $0x10] sm:$0xff] %v953
    %971 = vst [vmem:[%s967 + $0x18] sm:$0xff] %v954
    %972 = vst [vmem:[%s967 + $0x20] sm:$0xff] %v955
    %973 = vst [vmem:[%s967 + $0x28] sm:$0xff] %v956
    %974 = vst [vmem:[%s967 + $0x30] sm:$0xff] %v957
    %975 = vst [vmem:[%s967 + $0x38] sm:$0xff] %v958
    %976 = vst [vmem:[%s967 + $0x40] sm:$0xff] %v959
    %977 = vst [vmem:[%s967 + $0x48] sm:$0xff] %v960
    %978 = vst [vmem:[%s967 + $0x50] sm:$0xff] %v961
    %979 = vst [vmem:[%s967 + $0x58] sm:$0xff] %v962
    %980 = vst [vmem:[%s967 + $0x60] sm:$0xff] %v963
    %981 = vst [vmem:[%s967 + $0x68] sm:$0xff] %v964
    %982 = vst [vmem:[%s967 + $0x70] sm:$0xff] %v965
    %983 = vst [vmem:[%s967 + $0x78] sm:$0xff] %v966
    // Predicated region
    $region34: #{tpu_custom_call.1} parent=1 // pred_check
      _
    $region35: #{tpu_custom_call.1} parent=1 // pred_check_branch
      %985 = sbr.rel (0) target = $region37
    $region36: #{tpu_custom_call.1} parent=1 // pred_region
      %987 = vsyncadd [#allocation4], 0
      %s988 = sshll.u32 [#allocation9], 4
      %s989 = int_to_ptr.vmem [resolvable:$true] %s988
      %s990 = sshll.u32 %s5, 4
      %s991 = int_to_ptr.hbm [resolvable:$true] %s990
      %996 = dma.vmem_to_hbm [thread:$0]  %s989, 6144, %s991, [#allocation4], 256, 256, 16
    $region37: #{tpu_custom_call.1} parent=1 // pred_fallthru
      _
    // Predicated region
    $region38: #{tpu_custom_call.1} parent=1 // pred_check
      _
    $region39: #{tpu_custom_call.1} parent=1 // pred_check_branch
      %998 = sbr.rel (0) target = $region41
    $region40: #{tpu_custom_call.1} parent=1 // pred_region
      %1000 = vsyncadd [#allocation11], 0
      %s1001 = sshll.u32 [#allocation10], 4
      %s1002 = int_to_ptr.vmem [resolvable:$true] %s1001
      %s1003 = sshll.u32 %s6, 4
      %s1004 = int_to_ptr.hbm [resolvable:$true] %s1003
      %1009 = dma.vmem_to_hbm [thread:$0]  %s1002, 6144, %s1004, [#allocation11], 256, 256, 16
    $region41: #{tpu_custom_call.1} parent=1 // pred_fallthru
      _
    // Predicated region
    $region42: #{tpu_custom_call.1} parent=1 // pred_check
      _
    $region43: #{tpu_custom_call.1} parent=1 // pred_check_branch
      %1011 = sbr.rel (0) target = $region45
    $region44: #{tpu_custom_call.1} parent=1 // pred_region
      %1013 = dma.done [#allocation4], 6144
    $region45: #{tpu_custom_call.1} parent=1 // pred_fallthru
      _
    // Predicated region
    $region46: #{tpu_custom_call.1} parent=1 // pred_check
      _
    $region47: #{tpu_custom_call.1} parent=1 // pred_check_branch
      %1015 = sbr.rel (0) target = $region49
    $region48: #{tpu_custom_call.1} parent=1 // pred_region
      %1017 = dma.done [#allocation11], 6144
    $region49: #{tpu_custom_call.1} parent=1 // pred_fallthru
      _
    %1018 = vsyncpa [#allocation3], 1
    %1019 = vsyncpa [#allocation7], 1
    %1020 = vsyncpa [#allocation4], 1
    %1021 = vsyncpa [#allocation11], 1
    %1022 = vsyncpa [#allocation5], 1

</llo_original>
